<compile_context>
chip_gen: v7x
topology: tpu7x:2x2x1
jax: 0.10.0
libtpu: 0.0.40
codegen_flags: <defaults>
</compile_context>

<pallas_src>
import jax
import jax.numpy as jnp
from jax import lax
from jax.experimental import pallas as pl
from jax.experimental.pallas import tpu as pltpu


def _tucker_gemm_kernel(w_ref, x_ref, o_ref):
    # w_ref: (r0, prod_n)  -- recovered Tucker matrix, lane-dense, resident
    #                         (constant index_map => fetched once, reused).
    # x_ref: (batch_tile, r0)   input tile for this grid step.
    # o_ref: (batch_tile, prod_n) output tile.
    y = lax.dot_general(
        x_ref[...], w_ref[...],
        dimension_numbers=(((1,), (0,)), ((), ())),   # y = x @ W
        preferred_element_type=jnp.float32,
    )
    o_ref[...] = y.astype(o_ref.dtype)


def tucker_forward(core, a0, a1, x, *, batch_tile=None, operand_dtype=None):
    """TuckerTensor.forward(input=x) with sample_axis=True, use_core=True.

    core : (r1, r2, r0)   a0 : (n1, r1)   a1 : (n2, r2)   x : (B, r0)
    returns (B, n1*n2), row-major flatten over (n1, n2) — identical to the
    torch permute(batch-to-front) + flatten(use_batch=True) semantics.
    """
    r1, r2, r0 = core.shape
    n1 = a0.shape[0]
    n2 = a1.shape[0]
    B = x.shape[0]
    assert a0.shape == (n1, r1) and a1.shape == (n2, r2)
    assert x.shape == (B, r0)
    prod_n = n1 * n2

    # One-time W build (hoisted out of the hot kernel, per perf review).
    # W[j0, i1*n2 + i2] = sum_{j1,j2} A0[i1,j1] * A1[i2,j2] * G[j1,j2,j0]
    # Stored lane-dense: r0 in sublanes, prod_n in lanes.
    w = jnp.einsum("jko,pj,qk->opq", core, a0, a1).reshape(r0, prod_n)

    # Optional bf16 operand cast for v6e/v7x MXU rate / HBM bandwidth
    # (accumulation stays f32 inside the kernel).
    if operand_dtype is not None:
        w = w.astype(operand_dtype)
        x_op = x.astype(operand_dtype)
    else:
        x_op = x

    # Large batch tiles amortize the ~0.35 us per-grid-step overhead; keep a
    # multiple of 8 (sublanes) and within the scoped-VMEM defaults
    # (16 MiB v5e / 32 MiB v6e,v7x): 1024 x 128 f32 out block x2 buffers = 1 MiB.
    if batch_tile is None:
        batch_tile = B if B <= 1024 else 1024
    assert B % batch_tile == 0, (B, batch_tile)
    assert batch_tile % 8 == 0, batch_tile

    itemsize_in = jnp.dtype(x_op.dtype).itemsize
    itemsize_out = jnp.dtype(x.dtype).itemsize
    cost = pl.CostEstimate(
        flops=2 * B * prod_n * r0,
        transcendentals=0,
        bytes_accessed=(B * r0 * itemsize_in
                        + B * prod_n * itemsize_out
                        + r0 * prod_n * jnp.dtype(w.dtype).itemsize),
    )

    return pl.pallas_call(
        _tucker_gemm_kernel,
        out_shape=jax.ShapeDtypeStruct((B, prod_n), x.dtype),
        grid_spec=pltpu.PrefetchScalarGridSpec(
            num_scalar_prefetch=0,
            grid=(B // batch_tile,),
            in_specs=[
                pl.BlockSpec((r0, prod_n), lambda b: (0, 0)),       # W (resident)
                pl.BlockSpec((batch_tile, r0), lambda b: (b, 0)),   # x tile
            ],
            out_specs=pl.BlockSpec((batch_tile, prod_n), lambda b: (b, 0)),
        ),
        compiler_params=pltpu.CompilerParams(
            # Pure GEMM, no cross-step state -> safe to shard the batch axis
            # across v7x's two TensorCores.
            dimension_semantics=("parallel",)),
        cost_estimate=cost,
    )(w, x_op)


if __name__ == "__main__":
    # Module config: n = [8, 16], tucker_config = {'r': [4, 8], 'r0': 16},
    # sample_axis=True  ->  hidden_dim() == r0 == 16, input is (B, 16).
    n = (8, 16)
    r = (4, 8)
    r0 = 16
    B = 256            # modest test batch; batch_tile=128 exercises the grid
    batch_tile = 128

    key = jax.random.PRNGKey(0)
    k_a0, k_a1, k_core, k_x = jax.random.split(key, 4)
    # Deterministic stand-ins for the .normal_()-initialized parameters.
    a0 = jax.random.normal(k_a0, (n[0], r[0]), dtype=jnp.float32)       # factors[0]
    a1 = jax.random.normal(k_a1, (n[1], r[1]), dtype=jnp.float32)       # factors[1]
    core = jax.random.normal(k_core, (r[0], r[1], r0), dtype=jnp.float32)
    x = jax.random.normal(k_x, (B, r0), dtype=jnp.float32)              # input batch

    y = tucker_forward(core, a0, a1, x, batch_tile=batch_tile)
    y = jax.block_until_ready(y)

    # Pure-JAX reference of the same forward semantics.
    y_ref = jnp.einsum("pj,qk,jko,bo->bpq", a0, a1, core, x).reshape(B, -1)

    assert y.shape == (B, n[0] * n[1]), y.shape
    assert y.dtype == jnp.float32
    assert jnp.allclose(y, y_ref, rtol=1e-4, atol=1e-3), float(
        jnp.max(jnp.abs(y - y_ref)))
    print("KERNEL_OK")
</pallas_src>

<mosaic_0001>
module attributes {stable_mosaic.version = 11 : i64} {
  func.func @_tucker_gemm_kernel(%arg0: i32, %arg1: memref<16x128xf32, #tpu.memory_space<vmem>>, %arg2: memref<128x16xf32, #tpu.memory_space<vmem>>, %arg3: memref<128x128xf32, #tpu.memory_space<vmem>>) attributes {dimension_semantics = [#tpu.dimension_semantics<parallel>], iteration_bounds = array<i64: 2>, scalar_prefetch = 0 : i64, scratch_operands = 0 : i64, tpu.core_type = #tpu.core_type<tc>, window_params = [{pipeline_mode = #tpu.pipeline_mode<synchronous>, transform_indices = @transform_0, window_bounds = array<i64: 16, 128>}, {transform_indices = @transform_1, window_bounds = array<i64: 128, 16>}, {transform_indices = @transform_2, window_bounds = array<i64: 128, 128>}]} {
    %c0 = arith.constant 0 : index
    %c0_0 = arith.constant 0 : index
    %0 = vector.load %arg2[%c0, %c0_0] : memref<128x16xf32, #tpu.memory_space<vmem>>, vector<128x16xf32>
    %c0_1 = arith.constant 0 : index
    %c0_2 = arith.constant 0 : index
    %1 = vector.load %arg1[%c0_1, %c0_2] : memref<16x128xf32, #tpu.memory_space<vmem>>, vector<16x128xf32>
    %cst = arith.constant dense<0.000000e+00> : vector<128x128xf32>
    %2 = tpu.matmul %0, %1, %cst {dimension_numbers = #tpu.dot_dimension_numbers<[1], [0], [0], [1], [0, 0, 1, 1], [], []>} : vector<128x16xf32>, vector<16x128xf32>, vector<128x128xf32> -> vector<128x128xf32>
    %c0_3 = arith.constant 0 : index
    %c0_4 = arith.constant 0 : index
    %3 = vector.load %arg3[%c0_3, %c0_4] : memref<128x128xf32, #tpu.memory_space<vmem>>, vector<128x128xf32>
    tpu.vector_store %arg3[%c0_3, %c0_4], %2 {strides = array<i32>} : memref<128x128xf32, #tpu.memory_space<vmem>>, vector<128x128xf32>,
    return
  }
  func.func @transform_0(%arg0: i32) -> (i32, i32) {
    %c0_i32 = arith.constant 0 : i32
    %c0_i32_0 = arith.constant 0 : i32
    %c0_i32_1 = arith.constant 0 : i32
    return %c0_i32, %c0_i32_0 : i32, i32
  }
  func.func @transform_1(%arg0: i32) -> (i32, i32) {
    %c0_i32 = arith.constant 0 : i32
    %c0_i32_0 = arith.constant 0 : i32
    return %arg0, %c0_i32 : i32, i32
  }
  func.func @transform_2(%arg0: i32) -> (i32, i32) {
    %c0_i32 = arith.constant 0 : i32
    %c0_i32_0 = arith.constant 0 : i32
    return %arg0, %c0_i32 : i32, i32
  }
}

</mosaic_0001>

<llo_original>
// kernel: tpu_custom_call.1
$region0: #{tpu_custom_call.1}
  #allocation0 [shape = 'u32[]', space=smem, size = 0x4, offset = 0x4, fixed_abs, tag = 'smem constant byte address 0x4 - core index']
  #allocation1 [shape = 'u32[144,128]{1,0:T(1,128)}', space=vmem, size = 0x12000, scoped, tag = 'internal scratch']
  %s0 = inlined_call_operand.vmem [shape: f32[16,128], index: 0, kind: input, shape index: {}]
  %s1 = inlined_call_operand.vmem [shape: f32[256,16], index: 1, kind: input, shape index: {}]
  %s2 = inlined_call_operand.hbm [shape: f32[256,128], index: 2, kind: output, shape index: {}]
  %s3 = sld [smem:[#allocation0]]
  $region41: #{tpu_custom_call.1} parent=0
    _
  %s5 = ssub.s32 1, %s3
  %s6 = scalar_select 0, %s5, %s3
  $region1: #{tpu_custom_call.1} parent=0
    #allocation2 [shape = 'u8[131072]{0}', space=vmem, size = 0x20000, scoped, tag = 'output window, operand 0']
    #allocation3 [shape = 's32[2]{0}', space=sflag, size = 0x8, scoped, tag = 'scoped memory for tpu_custom_call.1']
    %7 = vsyncpa [#allocation3], 0
    %s8 = scalar_lea.sflag [#allocation3], 1
    %9 = vsyncpa %s8, 0
    loop: start=0, step=1, limit=4
    $region2: #{tpu_custom_call.1} parent=1 // loop_pre_header
      _
    $region3: #{tpu_custom_call.1} parent=1 // loop_header
      %s11 = sphi 0, %s15
      %p12 = scmp.ge.s32.totalorder %s11, 4
      %s19 = sphi 0, %s19
      %s21 = sphi 0, %s19
      %s22 = sphi 0, %s21
      %s36 = sphi 0, %s22
      %s42 = sphi 0, %s44
      %s45 = sphi 0, %s42
      %s46 = sphi 0, %s45
      %s62 = sphi 0, %s46
      %s68 = sphi 0, %s70
      %s71 = sphi 0, %s68
      %s72 = sphi 0, %s71
      %s88 = sphi 0, %s72
    $region4: #{tpu_custom_call.1} parent=1 // loop_header_branch
      %14 = sbr.rel (%p12) target = $region8
    $region5: #{tpu_custom_call.1} parent=1 // loop_body
      %s16 = ssub.s32 %s11, 1
      %s17 = ssub.s32 %s11, 2
      %s18 = sadd.s32 %s11, 1
      %s20 = sadd.s32 %s19, 1
      %p23 = scmp.eq.s32.totalorder %s11, 1
      %p24 = scmp.ne.s32.totalorder %s19, %s21
      %p25 = scmp.eq.s32.totalorder %s11, 0
      %p26 = por %p24, %p25
      %p27 = scmp.ne.s32.totalorder %s19, %s21
      %p28 = scmp.eq.s32.totalorder %s16, 1
      %p29 = por %p27, %p28
      %p30 = scmp.ne.s32.totalorder %s21, %s22
      %p31 = scmp.eq.s32.totalorder %s16, 0
      %p32 = por %p30, %p31
      %p33 = scmp.ne.s32.totalorder %s21, %s22
      %p34 = scmp.eq.s32.totalorder %s17, 1
      %p35 = por %p33, %p34
      %p37 = scmp.ne.s32.totalorder %s22, %s36
      %p38 = scmp.eq.s32.totalorder %s17, 0
      %p39 = por %p37, %p38
      %s40 = ssub.s32 %s11, %s18
      %p41 = scmp.eq.s32.totalorder %s40, 0
      %s43 = sadd.s32 %s42, 1
      %s44 = scalar_select %p41, %s42, %s43
      %p47 = pneg %p41
      %p48 = scmp.eq.s32.totalorder %s11, 1
      %p49 = por %p47, %p48
      %p50 = scmp.ne.s32.totalorder %s42, %s45
      %p51 = scmp.eq.s32.totalorder %s11, 0
      %p52 = por %p50, %p51
      %p53 = scmp.ne.s32.totalorder %s42, %s45
      %p54 = scmp.eq.s32.totalorder %s16, 1
      %p55 = por %p53, %p54
      %p56 = scmp.ne.s32.totalorder %s45, %s46
      %p57 = scmp.eq.s32.totalorder %s16, 0
      %p58 = por %p56, %p57
      %p59 = scmp.ne.s32.totalorder %s45, %s46
      %p60 = scmp.eq.s32.totalorder %s17, 1
      %p61 = por %p59, %p60
      %p63 = scmp.ne.s32.totalorder %s46, %s62
      %p64 = scmp.eq.s32.totalorder %s17, 0
      %p65 = por %p63, %p64
      %s66 = ssub.s32 %s11, %s18
      %p67 = scmp.eq.s32.totalorder %s66, 0
      %s69 = sadd.s32 %s68, 1
      %s70 = scalar_select %p67, %s68, %s69
      %p73 = pneg %p67
      %p74 = scmp.eq.s32.totalorder %s11, 1
      %p75 = por %p73, %p74
      %p76 = scmp.ne.s32.totalorder %s68, %s71
      %p77 = scmp.eq.s32.totalorder %s11, 0
      %p78 = por %p76, %p77
      %p79 = scmp.ne.s32.totalorder %s68, %s71
      %p80 = scmp.eq.s32.totalorder %s16, 1
      %p81 = por %p79, %p80
      %p82 = scmp.ne.s32.totalorder %s71, %s72
      %p83 = scmp.eq.s32.totalorder %s16, 0
      %p84 = por %p82, %p83
      %p85 = scmp.ne.s32.totalorder %s71, %s72
      %p86 = scmp.eq.s32.totalorder %s17, 1
      %p87 = por %p85, %p86
      %p89 = scmp.ne.s32.totalorder %s72, %s88
      %p90 = scmp.eq.s32.totalorder %s17, 0
      %p91 = por %p89, %p90
      %p92 = scmp.le.s32.totalorder 1, %s11
      %p93 = scmp.lt.s32.totalorder %s11, 3
      %p94 = pnand %p92, %p93
      %p95 = pneg %p94
      // Predicated region
      $region9: #{tpu_custom_call.1} parent=5 // pred_check
        _
      $region10: #{tpu_custom_call.1} parent=5 // pred_check_branch
        %97 = sbr.rel (%p94) target = $region12
      $region11: #{tpu_custom_call.1} parent=5 // pred_region
        %s98 = ssub.s32 %s11, 1
        // Predicated region
        $region13: #{tpu_custom_call.1} parent=11 // pred_check
          %p99 = pneg %p32
        $region14: #{tpu_custom_call.1} parent=11 // pred_check_branch
          %101 = sbr.rel (%p99) target = $region16
        $region15: #{tpu_custom_call.1} parent=11 // pred_region
          _
        $region16: #{tpu_custom_call.1} parent=11 // pred_fallthru
          _
      $region12: #{tpu_custom_call.1} parent=5 // pred_fallthru
        _
      %p102 = scmp.lt.s32.totalorder %s11, 2
      // Predicated region
      $region17: #{tpu_custom_call.1} parent=5 // pred_check
        %p103 = pneg %p102
      $region18: #{tpu_custom_call.1} parent=5 // pred_check_branch
        %105 = sbr.rel (%p103) target = $region20
      $region19: #{tpu_custom_call.1} parent=5 // pred_region
        // Predicated region
        $region21: #{tpu_custom_call.1} parent=19 // pred_check
          %p106 = pneg %p52
        $region22: #{tpu_custom_call.1} parent=19 // pred_check_branch
          %108 = sbr.rel (%p106) target = $region24
        $region23: #{tpu_custom_call.1} parent=19 // pred_region
          %s109 = smul.u32 16, %s11
          %p110 = scmp.lt.s32.totalorder %s109, 31
          %s111 = scalar_select %p110, %s109, 31
          %s112 = smul.addr %s111, 8
          %s113 = scalar_lea.vmem %s1, %s112
          %s114 = smul.u32 16, %s11
        $region24: #{tpu_custom_call.1} parent=19 // pred_fallthru
          _
      $region20: #{tpu_custom_call.1} parent=5 // pred_fallthru
        _
      %p115 = scmp.le.s32.totalorder 1, %s11
      %p116 = scmp.lt.s32.totalorder %s11, 3
      %p117 = pnand %p115, %p116
      %p118 = pneg %p117
      // Predicated region
      $region25: #{tpu_custom_call.1} parent=5 // pred_check
        _
      $region26: #{tpu_custom_call.1} parent=5 // pred_check_branch
        %120 = sbr.rel (%p117) target = $region28
      $region27: #{tpu_custom_call.1} parent=5 // pred_region
        %s121 = ssub.s32 %s11, 1
        %p122 = pneg %p32
        %p123 = pneg %p29
        %s124 = smul.u32 16, %s16
        %p125 = scmp.lt.s32.totalorder %s124, 31
        %s126 = scalar_select %p125, %s124, 31
        %s127 = smul.addr %s126, 8
        %s128 = scalar_lea.vmem %s1, %s127
        %p129 = pneg %p58
        %p130 = pneg %p55
        %p131 = pneg %p84
        %p132 = pneg %p81
        %s133 = sand.u32 %s71, 1
        %s134 = scalar_lea.sflag [#allocation3], %s133
        %s135 = sand.u32 %s71, 1
        %s136 = smul.addr %s135, 128
        %s137 = scalar_lea.vmem [#allocation2], %s136
        %s138 = smul.u32 16, %s16
        %p139 = scmp.lt.s32.totalorder %s138, 31
        %s140 = scalar_select %p139, %s138, 31
        %s141 = smul.addr %s140, 8
        %s142 = scalar_lea.vmem %s1, %s141
        %s143 = smul.u32 16, %s16
        %s144 = smul.u32 16, %s16
        %v145 = vld [vmem:[%s142] sm:$0xff]
        %v146 = vld [vmem:[%s142 + $0x8] sm:$0xff]
        %v147 = vld [vmem:[%s142 + $0x10] sm:$0xff]
        %v148 = vld [vmem:[%s142 + $0x18] sm:$0xff]
        %v149 = vld [vmem:[%s142 + $0x20] sm:$0xff]
        %v150 = vld [vmem:[%s142 + $0x28] sm:$0xff]
        %v151 = vld [vmem:[%s142 + $0x30] sm:$0xff]
        %v152 = vld [vmem:[%s142 + $0x38] sm:$0xff]
        %v153 = vld [vmem:[%s142 + $0x40] sm:$0xff]
        %v154 = vld [vmem:[%s142 + $0x48] sm:$0xff]
        %v155 = vld [vmem:[%s142 + $0x50] sm:$0xff]
        %v156 = vld [vmem:[%s142 + $0x58] sm:$0xff]
        %v157 = vld [vmem:[%s142 + $0x60] sm:$0xff]
        %v158 = vld [vmem:[%s142 + $0x68] sm:$0xff]
        %v159 = vld [vmem:[%s142 + $0x70] sm:$0xff]
        %v160 = vld [vmem:[%s142 + $0x78] sm:$0xff]
        %v161 = vld [vmem:[%s0] sm:$0xff]
        %v162 = vld [vmem:[%s0 + $0x8] sm:$0xff]
        %vm163 = vcmask 130048
        %v165 = vsel %vm163, %v145, 0
        %v168 = vsel %vm163, %v146, 0
        %v171 = vsel %vm163, %v147, 0
        %v174 = vsel %vm163, %v148, 0
        %v177 = vsel %vm163, %v149, 0
        %v180 = vsel %vm163, %v150, 0
        %v183 = vsel %vm163, %v151, 0
        %v186 = vsel %vm163, %v152, 0
        %v189 = vsel %vm163, %v153, 0
        %v192 = vsel %vm163, %v154, 0
        %v195 = vsel %vm163, %v155, 0
        %v198 = vsel %vm163, %v156, 0
        %v201 = vsel %vm163, %v157, 0
        %v204 = vsel %vm163, %v158, 0
        %v207 = vsel %vm163, %v159, 0
        %v210 = vsel %vm163, %v160, 0
        %212 = vmatprep.subr.mxu0 0.0
        %213 = vmatpush1.msra.mxu0 %v161
        %214 = vmatprep.subr.mxu0 0.0
        %215 = vmatpush1.msra.mxu0 %v162
        %216 = vmatprep.subr.mxu0 0.0
        %217 = vmatpush1.msra.mxu0 0.0
        %218 = vmatprep.subr.mxu0 0.0
        %219 = vmatpush1.msra.mxu0 0.0
        %220 = vmatprep.subr.mxu0 0.0
        %221 = vmatpush1.msra.mxu0 0.0
        %222 = vmatprep.subr.mxu0 0.0
        %223 = vmatpush1.msra.mxu0 0.0
        %224 = vmatprep.subr.mxu0 0.0
        %225 = vmatpush1.msra.mxu0 0.0
        %226 = vmatprep.subr.mxu0 0.0
        %227 = vmatpush1.msra.mxu0 0.0
        %228 = vmatprep.subr.mxu0 0.0
        %229 = vmatpush1.msra.mxu0 0.0
        %230 = vmatprep.subr.mxu0 0.0
        %231 = vmatpush1.msra.mxu0 0.0
        %232 = vmatprep.subr.mxu0 0.0
        %233 = vmatpush1.msra.mxu0 0.0
        %234 = vmatprep.subr.mxu0 0.0
        %235 = vmatpush1.msra.mxu0 0.0
        %236 = vmatprep.subr.mxu0 0.0
        %237 = vmatpush1.msra.mxu0 0.0
        %238 = vmatprep.subr.mxu0 0.0
        %239 = vmatpush1.msra.mxu0 0.0
        %240 = vmatprep.subr.mxu0 0.0
        %241 = vmatpush1.msra.mxu0 0.0
        %242 = vmatprep.subr.mxu0 0.0
        %243 = vmatpush1.msra.mxu0 0.0
        %244 = vmatprep.subr.mxu0 0.0
        %245 = vmatpush1.msra.mxu0 0.0
        %246 = vmatprep.subr.mxu0 0.0
        %247 = vmatpush1.msra.mxu0 0.0
        %248 = vmatprep.subr.mxu0 0.0
        %249 = vmatpush1.msra.mxu0 0.0
        %250 = vmatprep.subr.mxu0 0.0
        %251 = vmatpush1.msra.mxu0 0.0
        %252 = vmatprep.subr.mxu0 0.0
        %253 = vmatpush1.msra.mxu0 0.0
        %254 = vmatprep.subr.mxu0 0.0
        %255 = vmatpush1.msra.mxu0 0.0
        %256 = vmatprep.subr.mxu0 0.0
        %257 = vmatpush1.msra.mxu0 0.0
        %258 = vmatprep.subr.mxu0 0.0
        %259 = vmatpush1.msra.mxu0 0.0
        %260 = vmatprep.subr.mxu0 0.0
        %261 = vmatpush1.msra.mxu0 0.0
        %262 = vmatprep.subr.mxu0 0.0
        %263 = vmatpush1.msra.mxu0 0.0
        %264 = vmatprep.subr.mxu0 0.0
        %265 = vmatpush1.msra.mxu0 0.0
        %266 = vmatprep.subr.mxu0 0.0
        %267 = vmatpush1.msra.mxu0 0.0
        %268 = vmatprep.subr.mxu0 0.0
        %269 = vmatpush1.msra.mxu0 0.0
        %270 = vmatprep.subr.mxu0 0.0
        %271 = vmatpush1.msra.mxu0 0.0
        %272 = vmatprep.subr.mxu0 0.0
        %273 = vmatpush1.msra.mxu0 0.0
        %274 = vmatprep.subr.mxu0 0.0
        %275 = vmatpush1.msra.mxu0 0.0
        %276 = vmatprep.mubr.f32.mxu0 0.0
        %277 = vmatmul.mubr.f32.gmra.mrb[0].mxu0 %v165
        %v278 = vpop.f32.mrb[0].mxu0
        %v279 = vadd.f32 0.0, %v278
        %v280 = vpop.f32.mrb[0].mxu0
        %281 = vmatprep.mubr.f32.mxu0 0.0
        %282 = vmatmul.mubr.f32.gmra.mrb[0].mxu0 %v168
        %v283 = vpop.f32.mrb[0].mxu0
        %v284 = vadd.f32 0.0, %v283
        %v285 = vpop.f32.mrb[0].mxu0
        %286 = vmatprep.mubr.f32.mxu0 0.0
        %287 = vmatmul.mubr.f32.gmra.mrb[0].mxu0 %v171
        %v288 = vpop.f32.mrb[0].mxu0
        %v289 = vadd.f32 0.0, %v288
        %v290 = vpop.f32.mrb[0].mxu0
        %291 = vmatprep.mubr.f32.mxu0 0.0
        %292 = vmatmul.mubr.f32.gmra.mrb[0].mxu0 %v174
        %v293 = vpop.f32.mrb[0].mxu0
        %v294 = vadd.f32 0.0, %v293
        %v295 = vpop.f32.mrb[0].mxu0
        %296 = vmatprep.mubr.f32.mxu0 0.0
        %297 = vmatmul.mubr.f32.gmra.mrb[0].mxu0 %v177
        %v298 = vpop.f32.mrb[0].mxu0
        %v299 = vadd.f32 0.0, %v298
        %v300 = vpop.f32.mrb[0].mxu0
        %301 = vmatprep.mubr.f32.mxu0 0.0
        %302 = vmatmul.mubr.f32.gmra.mrb[0].mxu0 %v180
        %v303 = vpop.f32.mrb[0].mxu0
        %v304 = vadd.f32 0.0, %v303
        %v305 = vpop.f32.mrb[0].mxu0
        %306 = vmatprep.mubr.f32.mxu0 0.0
        %307 = vmatmul.mubr.f32.gmra.mrb[0].mxu0 %v183
        %v308 = vpop.f32.mrb[0].mxu0
        %v309 = vadd.f32 0.0, %v308
        %v310 = vpop.f32.mrb[0].mxu0
        %311 = vmatprep.mubr.f32.mxu0 0.0
        %312 = vmatmul.mubr.f32.gmra.mrb[0].mxu0 %v186
        %v313 = vpop.f32.mrb[0].mxu0
        %v314 = vadd.f32 0.0, %v313
        %v315 = vpop.f32.mrb[0].mxu0
        %316 = vmatprep.mubr.f32.mxu0 0.0
        %317 = vmatmul.mubr.f32.gmra.mrb[0].mxu0 %v189
        %v318 = vpop.f32.mrb[0].mxu0
        %v319 = vadd.f32 0.0, %v318
        %v320 = vpop.f32.mrb[0].mxu0
        %321 = vmatprep.mubr.f32.mxu0 0.0
        %322 = vmatmul.mubr.f32.gmra.mrb[0].mxu0 %v192
        %v323 = vpop.f32.mrb[0].mxu0
        %v324 = vadd.f32 0.0, %v323
        %v325 = vpop.f32.mrb[0].mxu0
        %326 = vmatprep.mubr.f32.mxu0 0.0
        %327 = vmatmul.mubr.f32.gmra.mrb[0].mxu0 %v195
        %v328 = vpop.f32.mrb[0].mxu0
        %v329 = vadd.f32 0.0, %v328
        %v330 = vpop.f32.mrb[0].mxu0
        %331 = vmatprep.mubr.f32.mxu0 0.0
        %332 = vmatmul.mubr.f32.gmra.mrb[0].mxu0 %v198
        %v333 = vpop.f32.mrb[0].mxu0
        %v334 = vadd.f32 0.0, %v333
        %v335 = vpop.f32.mrb[0].mxu0
        %336 = vmatprep.mubr.f32.mxu0 0.0
        %337 = vmatmul.mubr.f32.gmra.mrb[0].mxu0 %v201
        %v338 = vpop.f32.mrb[0].mxu0
        %v339 = vadd.f32 0.0, %v338
        %v340 = vpop.f32.mrb[0].mxu0
        %341 = vmatprep.mubr.f32.mxu0 0.0
        %342 = vmatmul.mubr.f32.gmra.mrb[0].mxu0 %v204
        %v343 = vpop.f32.mrb[0].mxu0
        %v344 = vadd.f32 0.0, %v343
        %v345 = vpop.f32.mrb[0].mxu0
        %346 = vmatprep.mubr.f32.mxu0 0.0
        %347 = vmatmul.mubr.f32.gmra.mrb[0].mxu0 %v207
        %v348 = vpop.f32.mrb[0].mxu0
        %v349 = vadd.f32 0.0, %v348
        %v350 = vpop.f32.mrb[0].mxu0
        %351 = vmatprep.mubr.f32.mxu0 0.0
        %352 = vmatmul.mubr.f32.gmra.mrb[0].mxu0 %v210
        %v353 = vpop.f32.mrb[0].mxu0
        %v354 = vadd.f32 0.0, %v353
        %v355 = vpop.f32.mrb[0].mxu0
        %356 = vdwg.mxu0
        %357 = vst [vmem:[%s137] sm:$0xff] %v279
        %358 = vst [vmem:[%s137 + $0x8] sm:$0xff] %v284
        %359 = vst [vmem:[%s137 + $0x10] sm:$0xff] %v289
        %360 = vst [vmem:[%s137 + $0x18] sm:$0xff] %v294
        %361 = vst [vmem:[%s137 + $0x20] sm:$0xff] %v299
        %362 = vst [vmem:[%s137 + $0x28] sm:$0xff] %v304
        %363 = vst [vmem:[%s137 + $0x30] sm:$0xff] %v309
        %364 = vst [vmem:[%s137 + $0x38] sm:$0xff] %v314
        %365 = vst [vmem:[%s137 + $0x40] sm:$0xff] %v319
        %366 = vst [vmem:[%s137 + $0x48] sm:$0xff] %v324
        %367 = vst [vmem:[%s137 + $0x50] sm:$0xff] %v329
        %368 = vst [vmem:[%s137 + $0x58] sm:$0xff] %v334
        %369 = vst [vmem:[%s137 + $0x60] sm:$0xff] %v339
        %370 = vst [vmem:[%s137 + $0x68] sm:$0xff] %v344
        %371 = vst [vmem:[%s137 + $0x70] sm:$0xff] %v349
        %372 = vst [vmem:[%s137 + $0x78] sm:$0xff] %v354
        %s373 = sand.u32 %s71, 1
        %s374 = scalar_lea.sflag [#allocation3], %s373
        %s375 = sand.u32 %s71, 1
        %s376 = smul.addr %s375, 128
        %s377 = scalar_lea.vmem [#allocation2], %s376
        // Predicated region
        $region29: #{tpu_custom_call.1} parent=27 // pred_check
          %p378 = pneg %p81
        $region30: #{tpu_custom_call.1} parent=27 // pred_check_branch
          %380 = sbr.rel (%p378) target = $region32
        $region31: #{tpu_custom_call.1} parent=27 // pred_region
          %s381 = smul.u32 16, %s16
          %s383 = ssub.s32 2048, 2048
          %384 = vsyncadd %s374, %s383
          %s385 = smul.addr %s381, 128
          %s386 = scalar_lea.hbm %s2, %s385
          %s387 = sshll.u32 %s377, 4
          %s388 = int_to_ptr.vmem [resolvable:$true] %s387
          %393 = dma.vmem_to_hbm [thread:$0]  %s388, 2048, %s386, %s374, 128, 128, 8
        $region32: #{tpu_custom_call.1} parent=27 // pred_fallthru
          _
      $region28: #{tpu_custom_call.1} parent=5 // pred_fallthru
        _
      %p394 = scmp.le.s32.totalorder 2, %s11
      // Predicated region
      $region33: #{tpu_custom_call.1} parent=5 // pred_check
        %p395 = pneg %p394
      $region34: #{tpu_custom_call.1} parent=5 // pred_check_branch
        %397 = sbr.rel (%p395) target = $region36
      $region35: #{tpu_custom_call.1} parent=5 // pred_region
        %s398 = ssub.s32 %s11, 2
        // Predicated region
        $region37: #{tpu_custom_call.1} parent=35 // pred_check
          %p399 = pneg %p87
        $region38: #{tpu_custom_call.1} parent=35 // pred_check_branch
          %401 = sbr.rel (%p399) target = $region40
        $region39: #{tpu_custom_call.1} parent=35 // pred_region
          %s402 = sand.u32 %s72, 1
          %s403 = scalar_lea.sflag [#allocation3], %s402
          %s404 = sand.u32 %s72, 1
          %s405 = smul.addr %s404, 128
          %s406 = scalar_lea.vmem [#allocation2], %s405
          %407 = dma.done %s403, 2048
        $region40: #{tpu_custom_call.1} parent=35 // pred_fallthru
          _
      $region36: #{tpu_custom_call.1} parent=5 // pred_fallthru
        _
    $region6: #{tpu_custom_call.1} parent=1 // loop_footer
      %s15 = sadd.s32 1, %s11
    $region7: #{tpu_custom_call.1} parent=1 // loop_footer_branch
      %10 = sbr.rel target = $region3
    $region8: #{tpu_custom_call.1} parent=1 // loop_exit
      _
    %408 = vsyncpa [#allocation3], 1
    %s409 = scalar_lea.sflag [#allocation3], 1
    %410 = vsyncpa %s409, 1

</llo_original>
